<compile_context>
chip_gen: v7x
topology: tpu7x:2x2x1
jax: 0.10.0
libtpu: 0.0.40
codegen_flags: <defaults>
</compile_context>

<pallas_src>
import math

import jax
import jax.numpy as jnp
from jax.experimental import pallas as pl
from jax.experimental.pallas import tpu as pltpu

_LANE = 128
_MIB = 1024 * 1024


def _copy_kernel(x_ref, o_ref):
    # Identity copy of one (block_r, C) sublane/lane-dense tile.
    o_ref[...] = x_ref[...]


def _round_up(x: int, m: int) -> int:
    return ((x + m - 1) // m) * m


def _round_down(x: int, m: int) -> int:
    return (x // m) * m


def _vmem_capacity_bytes() -> int:
    """Generation-aware VMEM capacity (128 MiB v5e/v6e, 64 MiB v7x per TC)."""
    try:
        info = pltpu.get_tpu_info()
        cap = int(getattr(info, "vmem_capacity_bytes", 0))
        if cap > 0:
            return cap
    except Exception:
        pass
    return 64 * _MIB  # conservative (v7x-sized) fallback, safe everywhere


def flatten_pallas(
    x: jax.Array,
    *,
    materialize: bool = True,
    donate_input: bool = False,
) -> jax.Array:
    """Equivalent of torch `batch.view([batch.shape[0], -1])`.

    materialize=False (recommended for production): metadata-only reshape,
    zero HBM traffic.  materialize=True: roofline-tuned Pallas identity copy
    usable as a fusion/materialization site.
    """
    n = x.shape[0]
    d = math.prod(x.shape[1:]) if x.ndim > 1 else 1
    out_shape = (n, d)

    # The flatten itself: metadata-only reshape (exact torch .view semantics).
    x_flat = jnp.reshape(x, out_shape)
    if not materialize:
        return x_flat

    total = n * d
    itemsize = jnp.dtype(x.dtype).itemsize
    # Dtype-aware packed sublane: 8 for 32-bit, 16 for bf16, 32 for int8/fp8.
    sub = max(8, (8 * 4) // max(1, itemsize))

    if total == 0 or total % (sub * _LANE) != 0:
        # No dense (sub, 128) slab exists; the pure reshape is exact and
        # already optimal (a copy kernel would only add HBM traffic).
        return x_flat

    # Lane-dense column width C (multiple of 128) such that R = total // C is
    # a multiple of the packed sublane. Prefer wider C (unmasked vst).
    c = _LANE
    for cand in (2048, 1024, 512, 256, 128):
        if total % (sub * cand) == 0:
            c = cand
            break
    r = total // c  # multiple of `sub` by construction

    # Block sizing: ~vmem_capacity/8 per block so double-buffered in + out
    # (4x block) plus slack stays inside VMEM on every generation
    # (~32 MiB of buffering on v7x's 64 MiB, ~64 MiB on v5e/v6e's 128 MiB),
    # while blocks are big enough to amortize ~0.35us per grid step.
    vmem_cap = _vmem_capacity_bytes()
    block_bytes = max(2 * _MIB, vmem_cap // 8)
    row_bytes = c * itemsize
    block_r = max(sub, _round_down(block_bytes // row_bytes, sub))
    block_r = min(block_r, _round_up(r, sub))

    # Keep >= 4 grid steps (lets the "parallel" axis actually split across
    # v7x's 2 TensorCores) as long as blocks stay >= ~1 MiB.
    if pl.cdiv(r, block_r) < 4:
        alt = max(sub, _round_up(pl.cdiv(r, 4), sub))
        if alt * row_bytes >= 1 * _MIB:
            block_r = alt

    # cdiv tiling: Pallas masks the partial last block (no tiny-divisor
    # degeneracy when r/sub has awkward factors).
    grid = (pl.cdiv(r, block_r),)
    block_bytes_actual = block_r * row_bytes

    # 2x-in + 2x-out double buffering + slack; cap at ~3/4 of physical VMEM
    # (<= ~48 MiB on v7x, up to ~96-100 MiB on v5e/v6e).
    vmem_limit = min(
        min(vmem_cap * 3 // 4, 100 * _MIB),
        max(4 * _MIB, 4 * block_bytes_actual + 2 * _MIB),
    )

    slab = jnp.reshape(x_flat, (r, c))
    out_slab = pl.pallas_call(
        _copy_kernel,
        out_shape=jax.ShapeDtypeStruct((r, c), x.dtype),
        grid_spec=pltpu.PrefetchScalarGridSpec(
            num_scalar_prefetch=0,
            grid=grid,
            in_specs=[pl.BlockSpec((block_r, c), lambda i: (i, 0))],
            out_specs=pl.BlockSpec((block_r, c), lambda i: (i, 0)),
        ),
        compiler_params=pltpu.CompilerParams(
            dimension_semantics=("parallel",),
            vmem_limit_bytes=vmem_limit,
        ),
        cost_estimate=pl.CostEstimate(
            flops=0,
            transcendentals=0,
            bytes_accessed=2 * total * itemsize,
        ),
        # In-place copy when the caller donates the input (halves peak HBM
        # footprint); off by default so a live input is never force-copied.
        input_output_aliases=({0: 0} if donate_input else {}),
    )(slab)
    return jnp.reshape(out_slab, out_shape)


if __name__ == "__main__":
    key = jax.random.PRNGKey(0)
    # Small NCHW input consistent with a conv-net feature map.
    x = jax.random.normal(key, (2, 4, 16, 16), dtype=jnp.float32)

    # Pallas (materializing) path.
    y = flatten_pallas(x)
    jax.block_until_ready(y)

    # Reference check against plain JAX reshape (same semantics as torch .view).
    y_ref = jnp.reshape(x, (x.shape[0], -1))
    assert y.shape == (2, 4 * 16 * 16), y.shape
    assert y.dtype == x.dtype
    assert bool(jnp.all(y == y_ref))

    # Zero-copy production path must match too.
    y0 = flatten_pallas(x, materialize=False)
    assert bool(jnp.all(y0 == y_ref))

    print("KERNEL_OK")
</pallas_src>

<mosaic_0001>
module attributes {stable_mosaic.version = 11 : i64} {
  func.func @_copy_kernel(%arg0: i32, %arg1: memref<8x256xf32, #tpu.memory_space<vmem>>, %arg2: memref<8x256xf32, #tpu.memory_space<vmem>>) attributes {dimension_semantics = [#tpu.dimension_semantics<parallel>], iteration_bounds = array<i64: 1>, scalar_prefetch = 0 : i64, scratch_operands = 0 : i64, tpu.core_type = #tpu.core_type<tc>, window_params = [{transform_indices = @transform_0, window_bounds = array<i64: 8, 256>}, {transform_indices = @transform_1, window_bounds = array<i64: 8, 256>}]} {
    %c0 = arith.constant 0 : index
    %c0_0 = arith.constant 0 : index
    %0 = vector.load %arg1[%c0, %c0_0] : memref<8x256xf32, #tpu.memory_space<vmem>>, vector<8x256xf32>
    %c0_1 = arith.constant 0 : index
    %c0_2 = arith.constant 0 : index
    %1 = vector.load %arg2[%c0_1, %c0_2] : memref<8x256xf32, #tpu.memory_space<vmem>>, vector<8x256xf32>
    tpu.vector_store %arg2[%c0_1, %c0_2], %0 {strides = array<i32>} : memref<8x256xf32, #tpu.memory_space<vmem>>, vector<8x256xf32>,
    return
  }
  func.func @transform_0(%arg0: i32) -> (i32, i32) {
    %c0_i32 = arith.constant 0 : i32
    %c0_i32_0 = arith.constant 0 : i32
    return %arg0, %c0_i32 : i32, i32
  }
  func.func @transform_1(%arg0: i32) -> (i32, i32) {
    %c0_i32 = arith.constant 0 : i32
    %c0_i32_0 = arith.constant 0 : i32
    return %arg0, %c0_i32 : i32, i32
  }
}

</mosaic_0001>

<llo_original>
// kernel: tpu_custom_call.1
$region0: #{tpu_custom_call.1}
  #allocation0 [shape = 'u32[]', space=smem, size = 0x4, offset = 0x4, fixed_abs, tag = 'smem constant byte address 0x4 - core index']
  #allocation1 [shape = 'u32[144,128]{1,0:T(1,128)}', space=vmem, size = 0x12000, scoped, tag = 'internal scratch']
  %s0 = inlined_call_operand.hbm [shape: f32[8,256], index: 0, kind: input, shape index: {}]
  %s1 = inlined_call_operand.hbm [shape: f32[8,256], index: 1, kind: output, shape index: {}]
  %s2 = sld [smem:[#allocation0]]
  $region18: #{tpu_custom_call.1} parent=0
    _
  %s4 = ssub.s32 1, %s2
  %s5 = scalar_select 0, %s4, %s2
  $region1: #{tpu_custom_call.1} parent=0
    #allocation2 [shape = 'u8[8192]{0}', space=vmem, size = 0x2000, scoped, tag = 'input window, operand 0, single buffered']
    #allocation3 [shape = 's32[1]{0}', space=sflag, size = 0x4, scoped, tag = 'scoped memory for tpu_custom_call.1']
    #allocation4 [shape = 's32[1]{0}', space=sflag, size = 0x4, scoped, tag = 'scoped memory for tpu_custom_call.1']
    #allocation5 [shape = 'u8[8192]{0}', space=vmem, size = 0x2000, scoped, tag = 'output window, operand 0, single buffered']
    %6 = vsyncpa [#allocation3], 0
    %7 = vsyncpa [#allocation4], 0
    // Predicated region
    $region2: #{tpu_custom_call.1} parent=1 // pred_check
      _
    $region3: #{tpu_custom_call.1} parent=1 // pred_check_branch
      %9 = sbr.rel (0) target = $region5
    $region4: #{tpu_custom_call.1} parent=1 // pred_region
      %s11 = ssub.s32 256, 256
      %12 = vsyncadd [#allocation3], %s11
      %s14 = sshll.u32 [#allocation2], 4
      %s15 = int_to_ptr.vmem [resolvable:$true] %s14
      %17 = dma.hbm_to_vmem [thread:$0]  %s0, 256, %s15, [#allocation3]
    $region5: #{tpu_custom_call.1} parent=1 // pred_fallthru
      _
    // Predicated region
    $region6: #{tpu_custom_call.1} parent=1 // pred_check
      _
    $region7: #{tpu_custom_call.1} parent=1 // pred_check_branch
      %19 = sbr.rel (0) target = $region9
    $region8: #{tpu_custom_call.1} parent=1 // pred_region
      %20 = dma.done [#allocation3], 256
    $region9: #{tpu_custom_call.1} parent=1 // pred_fallthru
      _
    %v21 = vld [vmem:[#allocation2] sm:$0xff]
    %v22 = vld [vmem:[#allocation2 + $0x8] sm:$0xff]
    %23 = vst [vmem:[#allocation5] sm:$0xff] %v21
    %24 = vst [vmem:[#allocation5 + $0x8] sm:$0xff] %v22
    // Predicated region
    $region10: #{tpu_custom_call.1} parent=1 // pred_check
      _
    $region11: #{tpu_custom_call.1} parent=1 // pred_check_branch
      %26 = sbr.rel (0) target = $region13
    $region12: #{tpu_custom_call.1} parent=1 // pred_region
      %s28 = ssub.s32 256, 256
      %29 = vsyncadd [#allocation4], %s28
      %s31 = sshll.u32 [#allocation5], 4
      %s32 = int_to_ptr.vmem [resolvable:$true] %s31
      %34 = dma.vmem_to_hbm [thread:$0]  %s32, 256, %s1, [#allocation4]
    $region13: #{tpu_custom_call.1} parent=1 // pred_fallthru
      _
    // Predicated region
    $region14: #{tpu_custom_call.1} parent=1 // pred_check
      _
    $region15: #{tpu_custom_call.1} parent=1 // pred_check_branch
      %36 = sbr.rel (0) target = $region17
    $region16: #{tpu_custom_call.1} parent=1 // pred_region
      %37 = dma.done [#allocation4], 256
    $region17: #{tpu_custom_call.1} parent=1 // pred_fallthru
      _
    %38 = vsyncpa [#allocation3], 1
    %39 = vsyncpa [#allocation4], 1

</llo_original>
